<compile_context>
chip_gen: v7x
topology: tpu7x:2x2x1
jax: 0.10.0
libtpu: 0.0.40
codegen_flags: <defaults>
</compile_context>

<pallas_src>
import jax
import jax.numpy as jnp
from jax.experimental import pallas as pl
from jax.experimental.pallas import tpu as pltpu


def _fc_concat_kernel(h_ref, u_ref, wt_ref, b_ref, o_ref):
    # h_ref : (tb, K)    u_ref : (tb, E)
    # wt_ref: (K, E)     b_ref : (1, E)
    # o_ref : (tb, 2E)   ->  [ relu(h @ Wt + b) | u ]
    res = jnp.dot(
        h_ref[...],
        wt_ref[...],
        preferred_element_type=jnp.float32,
        precision=jax.lax.Precision.HIGHEST,
    )
    res = jnp.maximum(res + b_ref[...], 0.0)
    out = jnp.concatenate(
        [res.astype(o_ref.dtype), u_ref[...].astype(o_ref.dtype)], axis=1
    )
    o_ref[...] = out


def full_connect_layer(user_embedding, h_v_embedding, weight, bias, *, tile_b=4096):
    """user_embedding: (B, E), h_v_embedding: (B, K=L+E),
    weight: (E, K) [PyTorch Linear layout], bias: (E,)  ->  (B, 2E)"""
    B, E = user_embedding.shape
    K = h_v_embedding.shape[1]
    assert weight.shape == (E, K)
    assert bias.shape == (E,)

    out_dtype = h_v_embedding.dtype

    # One-time layout plumbing outside the kernel (free per-step).
    w_t = jnp.asarray(weight).T            # (K, E) -- MXU-native orientation
    bias2d = jnp.asarray(bias).reshape(1, E)
    u = user_embedding.astype(out_dtype)

    # Batch tile: multiple of 8 sublanes (unless it covers the whole batch),
    # large enough to amortize per-step overhead, but small enough to keep
    # >=2 grid steps when the batch allows it (v7x has 2 TensorCores).
    if B >= 16:
        tb = min(tile_b, max(8, ((B // 2) // 8) * 8))
        tb = max(8, (tb // 8) * 8)
    else:
        tb = B                              # single full-extent block
    grid = (pl.cdiv(B, tb),)

    out = pl.pallas_call(
        _fc_concat_kernel,
        out_shape=jax.ShapeDtypeStruct((B, 2 * E), out_dtype),
        grid=grid,
        in_specs=[
            pl.BlockSpec((tb, K), lambda i: (i, 0)),   # h: pipelined over batch
            pl.BlockSpec((tb, E), lambda i: (i, 0)),   # user_emb: pipelined
            pl.BlockSpec((K, E), lambda i: (0, 0)),    # weight: VMEM-resident
            pl.BlockSpec((1, E), lambda i: (0, 0)),    # bias:   VMEM-resident
        ],
        out_specs=pl.BlockSpec((tb, 2 * E), lambda i: (i, 0)),
        compiler_params=pltpu.CompilerParams(
            dimension_semantics=("parallel",),          # megacore on v7x
        ),
    )(h_v_embedding, u, w_t, bias2d)

    return out


if __name__ == "__main__":
    L = 4
    embedding_size = 32
    batch = 8

    key = jax.random.PRNGKey(0)
    k_u, k_h, k_w, k_b = jax.random.split(key, 4)

    # Deterministic synthetic parameters (PyTorch default Linear init style:
    # uniform(-1/sqrt(fan_in), 1/sqrt(fan_in))).
    fan_in = L + embedding_size
    bound = 1.0 / jnp.sqrt(jnp.float32(fan_in))
    weight = jax.random.uniform(
        k_w, (embedding_size, fan_in), jnp.float32, -bound, bound
    )
    bias = jax.random.uniform(k_b, (embedding_size,), jnp.float32, -bound, bound)

    user_embedding = jax.random.normal(k_u, (batch, embedding_size), jnp.float32)
    h_v_embedding = jax.random.normal(k_h, (batch, fan_in), jnp.float32)

    out = full_connect_layer(user_embedding, h_v_embedding, weight, bias)
    out = jax.block_until_ready(out)

    # Reference check in plain JAX (same f32 precision as the kernel).
    fc_ref = jnp.maximum(
        jnp.dot(h_v_embedding, weight.T, precision=jax.lax.Precision.HIGHEST) + bias,
        0.0,
    )
    ref = jnp.concatenate([fc_ref, user_embedding], axis=1)

    assert out.shape == (batch, 2 * embedding_size)
    assert jnp.allclose(out, ref, atol=1e-5, rtol=1e-5)

    print("KERNEL_OK")
</pallas_src>

<mosaic_0001>
module attributes {stable_mosaic.version = 11 : i64} {
  func.func @_fc_concat_kernel(%arg0: i32, %arg1: memref<8x36xf32, #tpu.memory_space<vmem>>, %arg2: memref<8x32xf32, #tpu.memory_space<vmem>>, %arg3: memref<36x32xf32, #tpu.memory_space<vmem>>, %arg4: memref<1x32xf32, #tpu.memory_space<vmem>>, %arg5: memref<8x64xf32, #tpu.memory_space<vmem>>) attributes {dimension_semantics = [#tpu.dimension_semantics<parallel>], iteration_bounds = array<i64: 1>, scalar_prefetch = 0 : i64, scratch_operands = 0 : i64, tpu.core_type = #tpu.core_type<tc>, window_params = [{transform_indices = @transform_0, window_bounds = array<i64: 8, 36>}, {transform_indices = @transform_1, window_bounds = array<i64: 8, 32>}, {pipeline_mode = #tpu.pipeline_mode<synchronous>, transform_indices = @transform_2, window_bounds = array<i64: 36, 32>}, {pipeline_mode = #tpu.pipeline_mode<synchronous>, transform_indices = @transform_3, window_bounds = array<i64: 1, 32>}, {transform_indices = @transform_4, window_bounds = array<i64: 8, 64>}]} {
    %c0 = arith.constant 0 : index
    %c0_0 = arith.constant 0 : index
    %0 = vector.load %arg1[%c0, %c0_0] : memref<8x36xf32, #tpu.memory_space<vmem>>, vector<8x36xf32>
    %c0_1 = arith.constant 0 : index
    %c0_2 = arith.constant 0 : index
    %1 = vector.load %arg3[%c0_1, %c0_2] : memref<36x32xf32, #tpu.memory_space<vmem>>, vector<36x32xf32>
    %cst = arith.constant dense<0.000000e+00> : vector<8x32xf32>
    %2 = tpu.matmul %0, %1, %cst {dimension_numbers = #tpu.dot_dimension_numbers<[1], [0], [0], [1], [0, 0, 1, 1], [], []>, precision = #tpu.contract_precision<fp32>} : vector<8x36xf32>, vector<36x32xf32>, vector<8x32xf32> -> vector<8x32xf32>
    %c0_3 = arith.constant 0 : index
    %c0_4 = arith.constant 0 : index
    %3 = vector.load %arg4[%c0_3, %c0_4] : memref<1x32xf32, #tpu.memory_space<vmem>>, vector<1x32xf32>
    %4 = vector.broadcast %3 : vector<1x32xf32> to vector<8x32xf32>
    %5 = arith.addf %2, %4 : vector<8x32xf32>
    %cst_5 = arith.constant 0.000000e+00 : f32
    %6 = vector.broadcast %cst_5 : f32 to vector<8x32xf32>
    %7 = arith.maximumf %5, %6 : vector<8x32xf32>
    %c0_6 = arith.constant 0 : index
    %c0_7 = arith.constant 0 : index
    %8 = vector.load %arg2[%c0_6, %c0_7] : memref<8x32xf32, #tpu.memory_space<vmem>>, vector<8x32xf32>
    %9 = tpu.concatenate %7, %8 in 1 : vector<8x32xf32>, vector<8x32xf32> -> vector<8x64xf32>
    %c0_8 = arith.constant 0 : index
    %c0_9 = arith.constant 0 : index
    %10 = vector.load %arg5[%c0_8, %c0_9] : memref<8x64xf32, #tpu.memory_space<vmem>>, vector<8x64xf32>
    tpu.vector_store %arg5[%c0_8, %c0_9], %9 {strides = array<i32>} : memref<8x64xf32, #tpu.memory_space<vmem>>, vector<8x64xf32>,
    return
  }
  func.func @transform_0(%arg0: i32) -> (i32, i32) {
    %c0_i32 = arith.constant 0 : i32
    %c0_i32_0 = arith.constant 0 : i32
    return %arg0, %c0_i32 : i32, i32
  }
  func.func @transform_1(%arg0: i32) -> (i32, i32) {
    %c0_i32 = arith.constant 0 : i32
    %c0_i32_0 = arith.constant 0 : i32
    return %arg0, %c0_i32 : i32, i32
  }
  func.func @transform_2(%arg0: i32) -> (i32, i32) {
    %c0_i32 = arith.constant 0 : i32
    %c0_i32_0 = arith.constant 0 : i32
    %c0_i32_1 = arith.constant 0 : i32
    return %c0_i32, %c0_i32_0 : i32, i32
  }
  func.func @transform_3(%arg0: i32) -> (i32, i32) {
    %c0_i32 = arith.constant 0 : i32
    %c0_i32_0 = arith.constant 0 : i32
    %c0_i32_1 = arith.constant 0 : i32
    return %c0_i32, %c0_i32_0 : i32, i32
  }
  func.func @transform_4(%arg0: i32) -> (i32, i32) {
    %c0_i32 = arith.constant 0 : i32
    %c0_i32_0 = arith.constant 0 : i32
    return %arg0, %c0_i32 : i32, i32
  }
}

</mosaic_0001>

<llo_original>
// kernel: tpu_custom_call.1
$region0: #{tpu_custom_call.1}
  #allocation0 [shape = 'u32[]', space=smem, size = 0x4, offset = 0x4, fixed_abs, tag = 'smem constant byte address 0x4 - core index']
  #allocation1 [shape = 'u32[144,128]{1,0:T(1,128)}', space=vmem, size = 0x12000, scoped, tag = 'internal scratch']
  %s0 = inlined_call_operand.vmem [shape: f32[8,36], index: 0, kind: input, shape index: {}]
  %s1 = inlined_call_operand.vmem [shape: f32[8,32], index: 1, kind: input, shape index: {}]
  %s2 = inlined_call_operand.vmem [shape: f32[36,32], index: 2, kind: input, shape index: {}]
  %s3 = inlined_call_operand.vmem [shape: f32[1,32], index: 3, kind: input, shape index: {}]
  %s4 = inlined_call_operand.hbm [shape: f32[8,64], index: 4, kind: output, shape index: {}]
  %s5 = sld [smem:[#allocation0]]
  $region26: #{tpu_custom_call.1} parent=0
    _
  %s7 = ssub.s32 1, %s5
  %s8 = scalar_select 0, %s7, %s5
  $region1: #{tpu_custom_call.1} parent=0
    #allocation2 [shape = 'u8[4096]{0}', space=vmem, size = 0x1000, scoped, tag = 'output window, operand 0, single buffered']
    #allocation3 [shape = 's32[1]{0}', space=sflag, size = 0x4, scoped, tag = 'scoped memory for tpu_custom_call.1']
    %9 = vsyncpa [#allocation3], 0
    // Predicated region
    $region2: #{tpu_custom_call.1} parent=1 // pred_check
      _
    $region3: #{tpu_custom_call.1} parent=1 // pred_check_branch
      %11 = sbr.rel (0) target = $region5
    $region4: #{tpu_custom_call.1} parent=1 // pred_region
      _
    $region5: #{tpu_custom_call.1} parent=1 // pred_fallthru
      _
    // Predicated region
    $region6: #{tpu_custom_call.1} parent=1 // pred_check
      _
    $region7: #{tpu_custom_call.1} parent=1 // pred_check_branch
      %13 = sbr.rel (0) target = $region9
    $region8: #{tpu_custom_call.1} parent=1 // pred_region
      _
    $region9: #{tpu_custom_call.1} parent=1 // pred_fallthru
      _
    // Predicated region
    $region10: #{tpu_custom_call.1} parent=1 // pred_check
      _
    $region11: #{tpu_custom_call.1} parent=1 // pred_check_branch
      %15 = sbr.rel (0) target = $region13
    $region12: #{tpu_custom_call.1} parent=1 // pred_region
      _
    $region13: #{tpu_custom_call.1} parent=1 // pred_fallthru
      _
    // Predicated region
    $region14: #{tpu_custom_call.1} parent=1 // pred_check
      _
    $region15: #{tpu_custom_call.1} parent=1 // pred_check_branch
      %17 = sbr.rel (0) target = $region17
    $region16: #{tpu_custom_call.1} parent=1 // pred_region
      _
    $region17: #{tpu_custom_call.1} parent=1 // pred_fallthru
      _
    %v18 = vld [vmem:[%s0] sm:$0xff]
    %v19 = vld [vmem:[%s2] sm:$0xff]
    %v20 = vld [vmem:[%s2 + $0x8] sm:$0xff]
    %v21 = vld [vmem:[%s2 + $0x10] sm:$0xff]
    %v22 = vld [vmem:[%s2 + $0x18] sm:$0xff]
    %v23 = vld [vmem:[%s2 + $0x20] sm:$0xf]
    %v24 = vld [vmem:[%s3] sm:$0x1]
    %v26 = vlaneseq
    %v27 = vshrl.u32 %v26, 7
    %v28 = vsub.s32 0, %v27
    %v29 = vrot.slane %v24, %v28
    %vm31 = vcmask 293888
    %v33 = vsel %vm31, %v18, 0
    %vm35 = vcmask 1043456
    %v37 = vsel %vm35, %v23, 0
    %39 = vmatprep.subr.mxu0 0.0
    %v40 = vand.u32 %v19, 4294901760
    %41 = vmatpush1.msra.mxu0 %v40
    %42 = vmatprep.subr.mxu0 0.0
    %v43 = vand.u32 %v20, 4294901760
    %44 = vmatpush1.msra.mxu0 %v43
    %45 = vmatprep.subr.mxu0 0.0
    %v46 = vand.u32 %v21, 4294901760
    %47 = vmatpush1.msra.mxu0 %v46
    %48 = vmatprep.subr.mxu0 0.0
    %v49 = vand.u32 %v22, 4294901760
    %50 = vmatpush1.msra.mxu0 %v49
    %51 = vmatprep.subr.mxu0 0.0
    %v52 = vand.u32 %v37, 4294901760
    %53 = vmatpush1.msra.mxu0 %v52
    %54 = vmatprep.subr.mxu0 0.0
    %55 = vmatpush1.msra.mxu0 0.0
    %56 = vmatprep.subr.mxu0 0.0
    %57 = vmatpush1.msra.mxu0 0.0
    %58 = vmatprep.subr.mxu0 0.0
    %59 = vmatpush1.msra.mxu0 0.0
    %60 = vmatprep.subr.mxu0 0.0
    %61 = vmatpush1.msra.mxu0 0.0
    %62 = vmatprep.subr.mxu0 0.0
    %63 = vmatpush1.msra.mxu0 0.0
    %64 = vmatprep.subr.mxu0 0.0
    %65 = vmatpush1.msra.mxu0 0.0
    %66 = vmatprep.subr.mxu0 0.0
    %67 = vmatpush1.msra.mxu0 0.0
    %68 = vmatprep.subr.mxu0 0.0
    %69 = vmatpush1.msra.mxu0 0.0
    %70 = vmatprep.subr.mxu0 0.0
    %71 = vmatpush1.msra.mxu0 0.0
    %72 = vmatprep.subr.mxu0 0.0
    %73 = vmatpush1.msra.mxu0 0.0
    %74 = vmatprep.subr.mxu0 0.0
    %75 = vmatpush1.msra.mxu0 0.0
    %76 = vmatprep.subr.mxu0 0.0
    %77 = vmatpush1.msra.mxu0 0.0
    %78 = vmatprep.subr.mxu0 0.0
    %79 = vmatpush1.msra.mxu0 0.0
    %80 = vmatprep.subr.mxu0 0.0
    %81 = vmatpush1.msra.mxu0 0.0
    %82 = vmatprep.subr.mxu0 0.0
    %83 = vmatpush1.msra.mxu0 0.0
    %84 = vmatprep.subr.mxu0 0.0
    %85 = vmatpush1.msra.mxu0 0.0
    %86 = vmatprep.subr.mxu0 0.0
    %87 = vmatpush1.msra.mxu0 0.0
    %88 = vmatprep.subr.mxu0 0.0
    %89 = vmatpush1.msra.mxu0 0.0
    %90 = vmatprep.subr.mxu0 0.0
    %91 = vmatpush1.msra.mxu0 0.0
    %92 = vmatprep.subr.mxu0 0.0
    %93 = vmatpush1.msra.mxu0 0.0
    %94 = vmatprep.subr.mxu0 0.0
    %95 = vmatpush1.msra.mxu0 0.0
    %96 = vmatprep.subr.mxu0 0.0
    %97 = vmatpush1.msra.mxu0 0.0
    %98 = vmatprep.subr.mxu0 0.0
    %99 = vmatpush1.msra.mxu0 0.0
    %100 = vmatprep.subr.mxu0 0.0
    %101 = vmatpush1.msra.mxu0 0.0
    %102 = vmatprep.subr.mxu0 0.0
    %103 = vmatpush1.msra.mxu0 0.0
    %104 = vmatprep.subr.mxu0 0.0
    %105 = vmatpush1.msra.mxu0 0.0
    %106 = vmatprep.subr.mxu0 0.0
    %107 = vmatpush1.msra.mxu0 0.0
    %108 = vmatprep.mubr.f32.mxu0 0.0
    %v109 = vand.u32 %v33, 4294901760
    %v110 = vsub.f32 %v33, %v109
    %v111 = vand.u32 %v110, 4294901760
    %v112 = vsub.f32 %v110, %v111
    %v113 = vand.u32 %v112, 4294901760
    %114 = vmatmul.mubr.f32.gmra.mrb[0].mxu0 %v113
    %v115 = vpop.f32.mrb[0].mxu0
    %v116 = vadd.f32 %v29, %v115
    %v117 = vpop.f32.mrb[0].mxu0
    %118 = vdwg.mxu0
    %119 = vmatprep.subr.mxu0 0.0
    %v120 = vand.u32 %v19, 4294901760
    %v121 = vsub.f32 %v19, %v120
    %v122 = vand.u32 %v121, 4294901760
    %v123 = vsub.f32 %v121, %v122
    %v124 = vand.u32 %v123, 4294901760
    %125 = vmatpush1.msra.mxu0 %v124
    %126 = vmatprep.subr.mxu0 0.0
    %v127 = vand.u32 %v20, 4294901760
    %v128 = vsub.f32 %v20, %v127
    %v129 = vand.u32 %v128, 4294901760
    %v130 = vsub.f32 %v128, %v129
    %v131 = vand.u32 %v130, 4294901760
    %132 = vmatpush1.msra.mxu0 %v131
    %133 = vmatprep.subr.mxu0 0.0
    %v134 = vand.u32 %v21, 4294901760
    %v135 = vsub.f32 %v21, %v134
    %v136 = vand.u32 %v135, 4294901760
    %v137 = vsub.f32 %v135, %v136
    %v138 = vand.u32 %v137, 4294901760
    %139 = vmatpush1.msra.mxu0 %v138
    %140 = vmatprep.subr.mxu0 0.0
    %v141 = vand.u32 %v22, 4294901760
    %v142 = vsub.f32 %v22, %v141
    %v143 = vand.u32 %v142, 4294901760
    %v144 = vsub.f32 %v142, %v143
    %v145 = vand.u32 %v144, 4294901760
    %146 = vmatpush1.msra.mxu0 %v145
    %147 = vmatprep.subr.mxu0 0.0
    %v148 = vand.u32 %v37, 4294901760
    %v149 = vsub.f32 %v37, %v148
    %v150 = vand.u32 %v149, 4294901760
    %v151 = vsub.f32 %v149, %v150
    %v152 = vand.u32 %v151, 4294901760
    %153 = vmatpush1.msra.mxu0 %v152
    %154 = vmatprep.subr.mxu0 0.0
    %155 = vmatpush1.msra.mxu0 0.0
    %156 = vmatprep.subr.mxu0 0.0
    %157 = vmatpush1.msra.mxu0 0.0
    %158 = vmatprep.subr.mxu0 0.0
    %159 = vmatpush1.msra.mxu0 0.0
    %160 = vmatprep.subr.mxu0 0.0
    %161 = vmatpush1.msra.mxu0 0.0
    %162 = vmatprep.subr.mxu0 0.0
    %163 = vmatpush1.msra.mxu0 0.0
    %164 = vmatprep.subr.mxu0 0.0
    %165 = vmatpush1.msra.mxu0 0.0
    %166 = vmatprep.subr.mxu0 0.0
    %167 = vmatpush1.msra.mxu0 0.0
    %168 = vmatprep.subr.mxu0 0.0
    %169 = vmatpush1.msra.mxu0 0.0
    %170 = vmatprep.subr.mxu0 0.0
    %171 = vmatpush1.msra.mxu0 0.0
    %172 = vmatprep.subr.mxu0 0.0
    %173 = vmatpush1.msra.mxu0 0.0
    %174 = vmatprep.subr.mxu0 0.0
    %175 = vmatpush1.msra.mxu0 0.0
    %176 = vmatprep.subr.mxu0 0.0
    %177 = vmatpush1.msra.mxu0 0.0
    %178 = vmatprep.subr.mxu0 0.0
    %179 = vmatpush1.msra.mxu0 0.0
    %180 = vmatprep.subr.mxu0 0.0
    %181 = vmatpush1.msra.mxu0 0.0
    %182 = vmatprep.subr.mxu0 0.0
    %183 = vmatpush1.msra.mxu0 0.0
    %184 = vmatprep.subr.mxu0 0.0
    %185 = vmatpush1.msra.mxu0 0.0
    %186 = vmatprep.subr.mxu0 0.0
    %187 = vmatpush1.msra.mxu0 0.0
    %188 = vmatprep.subr.mxu0 0.0
    %189 = vmatpush1.msra.mxu0 0.0
    %190 = vmatprep.subr.mxu0 0.0
    %191 = vmatpush1.msra.mxu0 0.0
    %192 = vmatprep.subr.mxu0 0.0
    %193 = vmatpush1.msra.mxu0 0.0
    %194 = vmatprep.subr.mxu0 0.0
    %195 = vmatpush1.msra.mxu0 0.0
    %196 = vmatprep.subr.mxu0 0.0
    %197 = vmatpush1.msra.mxu0 0.0
    %198 = vmatprep.subr.mxu0 0.0
    %199 = vmatpush1.msra.mxu0 0.0
    %200 = vmatprep.subr.mxu0 0.0
    %201 = vmatpush1.msra.mxu0 0.0
    %202 = vmatprep.subr.mxu0 0.0
    %203 = vmatpush1.msra.mxu0 0.0
    %204 = vmatprep.subr.mxu0 0.0
    %205 = vmatpush1.msra.mxu0 0.0
    %206 = vmatprep.subr.mxu0 0.0
    %207 = vmatpush1.msra.mxu0 0.0
    %208 = vmatprep.mubr.f32.mxu0 0.0
    %v209 = vand.u32 %v33, 4294901760
    %210 = vmatmul.mubr.f32.gmra.mrb[0].mxu0 %v209
    %v211 = vpop.f32.mrb[0].mxu0
    %v212 = vadd.f32 %v116, %v211
    %v213 = vpop.f32.mrb[0].mxu0
    %214 = vdwg.mxu0
    %215 = vmatprep.subr.mxu0 0.0
    %v216 = vand.u32 %v19, 4294901760
    %v217 = vsub.f32 %v19, %v216
    %218 = vmatpush1.msra.mxu0 %v217
    %219 = vmatprep.subr.mxu0 0.0
    %v220 = vand.u32 %v20, 4294901760
    %v221 = vsub.f32 %v20, %v220
    %222 = vmatpush1.msra.mxu0 %v221
    %223 = vmatprep.subr.mxu0 0.0
    %v224 = vand.u32 %v21, 4294901760
    %v225 = vsub.f32 %v21, %v224
    %226 = vmatpush1.msra.mxu0 %v225
    %227 = vmatprep.subr.mxu0 0.0
    %v228 = vand.u32 %v22, 4294901760
    %v229 = vsub.f32 %v22, %v228
    %230 = vmatpush1.msra.mxu0 %v229
    %231 = vmatprep.subr.mxu0 0.0
    %v232 = vand.u32 %v37, 4294901760
    %v233 = vsub.f32 %v37, %v232
    %234 = vmatpush1.msra.mxu0 %v233
    %235 = vmatprep.subr.mxu0 0.0
    %236 = vmatpush1.msra.mxu0 0.0
    %237 = vmatprep.subr.mxu0 0.0
    %238 = vmatpush1.msra.mxu0 0.0
    %239 = vmatprep.subr.mxu0 0.0
    %240 = vmatpush1.msra.mxu0 0.0
    %241 = vmatprep.subr.mxu0 0.0
    %242 = vmatpush1.msra.mxu0 0.0
    %243 = vmatprep.subr.mxu0 0.0
    %244 = vmatpush1.msra.mxu0 0.0
    %245 = vmatprep.subr.mxu0 0.0
    %246 = vmatpush1.msra.mxu0 0.0
    %247 = vmatprep.subr.mxu0 0.0
    %248 = vmatpush1.msra.mxu0 0.0
    %249 = vmatprep.subr.mxu0 0.0
    %250 = vmatpush1.msra.mxu0 0.0
    %251 = vmatprep.subr.mxu0 0.0
    %252 = vmatpush1.msra.mxu0 0.0
    %253 = vmatprep.subr.mxu0 0.0
    %254 = vmatpush1.msra.mxu0 0.0
    %255 = vmatprep.subr.mxu0 0.0
    %256 = vmatpush1.msra.mxu0 0.0
    %257 = vmatprep.subr.mxu0 0.0
    %258 = vmatpush1.msra.mxu0 0.0
    %259 = vmatprep.subr.mxu0 0.0
    %260 = vmatpush1.msra.mxu0 0.0
    %261 = vmatprep.subr.mxu0 0.0
    %262 = vmatpush1.msra.mxu0 0.0
    %263 = vmatprep.subr.mxu0 0.0
    %264 = vmatpush1.msra.mxu0 0.0
    %265 = vmatprep.subr.mxu0 0.0
    %266 = vmatpush1.msra.mxu0 0.0
    %267 = vmatprep.subr.mxu0 0.0
    %268 = vmatpush1.msra.mxu0 0.0
    %269 = vmatprep.subr.mxu0 0.0
    %270 = vmatpush1.msra.mxu0 0.0
    %271 = vmatprep.subr.mxu0 0.0
    %272 = vmatpush1.msra.mxu0 0.0
    %273 = vmatprep.subr.mxu0 0.0
    %274 = vmatpush1.msra.mxu0 0.0
    %275 = vmatprep.subr.mxu0 0.0
    %276 = vmatpush1.msra.mxu0 0.0
    %277 = vmatprep.subr.mxu0 0.0
    %278 = vmatpush1.msra.mxu0 0.0
    %279 = vmatprep.subr.mxu0 0.0
    %280 = vmatpush1.msra.mxu0 0.0
    %281 = vmatprep.subr.mxu0 0.0
    %282 = vmatpush1.msra.mxu0 0.0
    %283 = vmatprep.subr.mxu0 0.0
    %284 = vmatpush1.msra.mxu0 0.0
    %285 = vmatprep.subr.mxu0 0.0
    %286 = vmatpush1.msra.mxu0 0.0
    %287 = vmatprep.subr.mxu0 0.0
    %288 = vmatpush1.msra.mxu0 0.0
    %289 = vmatprep.mubr.f32.mxu0 0.0
    %v290 = vand.u32 %v33, 4294901760
    %v291 = vsub.f32 %v33, %v290
    %292 = vmatmul.mubr.f32.gmra.mrb[0].mxu0 %v291
    %v293 = vpop.f32.mrb[0].mxu0
    %v294 = vadd.f32 %v212, %v293
    %v295 = vpop.f32.mrb[0].mxu0
    %296 = vdwg.mxu0
    %297 = vmatprep.subr.mxu0 0.0
    %v298 = vand.u32 %v19, 4294901760
    %299 = vmatpush1.msra.mxu0 %v298
    %300 = vmatprep.subr.mxu0 0.0
    %v301 = vand.u32 %v20, 4294901760
    %302 = vmatpush1.msra.mxu0 %v301
    %303 = vmatprep.subr.mxu0 0.0
    %v304 = vand.u32 %v21, 4294901760
    %305 = vmatpush1.msra.mxu0 %v304
    %306 = vmatprep.subr.mxu0 0.0
    %v307 = vand.u32 %v22, 4294901760
    %308 = vmatpush1.msra.mxu0 %v307
    %309 = vmatprep.subr.mxu0 0.0
    %v310 = vand.u32 %v37, 4294901760
    %311 = vmatpush1.msra.mxu0 %v310
    %312 = vmatprep.subr.mxu0 0.0
    %313 = vmatpush1.msra.mxu0 0.0
    %314 = vmatprep.subr.mxu0 0.0
    %315 = vmatpush1.msra.mxu0 0.0
    %316 = vmatprep.subr.mxu0 0.0
    %317 = vmatpush1.msra.mxu0 0.0
    %318 = vmatprep.subr.mxu0 0.0
    %319 = vmatpush1.msra.mxu0 0.0
    %320 = vmatprep.subr.mxu0 0.0
    %321 = vmatpush1.msra.mxu0 0.0
    %322 = vmatprep.subr.mxu0 0.0
    %323 = vmatpush1.msra.mxu0 0.0
    %324 = vmatprep.subr.mxu0 0.0
    %325 = vmatpush1.msra.mxu0 0.0
    %326 = vmatprep.subr.mxu0 0.0
    %327 = vmatpush1.msra.mxu0 0.0
    %328 = vmatprep.subr.mxu0 0.0
    %329 = vmatpush1.msra.mxu0 0.0
    %330 = vmatprep.subr.mxu0 0.0
    %331 = vmatpush1.msra.mxu0 0.0
    %332 = vmatprep.subr.mxu0 0.0
    %333 = vmatpush1.msra.mxu0 0.0
    %334 = vmatprep.subr.mxu0 0.0
    %335 = vmatpush1.msra.mxu0 0.0
    %336 = vmatprep.subr.mxu0 0.0
    %337 = vmatpush1.msra.mxu0 0.0
    %338 = vmatprep.subr.mxu0 0.0
    %339 = vmatpush1.msra.mxu0 0.0
    %340 = vmatprep.subr.mxu0 0.0
    %341 = vmatpush1.msra.mxu0 0.0
    %342 = vmatprep.subr.mxu0 0.0
    %343 = vmatpush1.msra.mxu0 0.0
    %344 = vmatprep.subr.mxu0 0.0
    %345 = vmatpush1.msra.mxu0 0.0
    %346 = vmatprep.subr.mxu0 0.0
    %347 = vmatpush1.msra.mxu0 0.0
    %348 = vmatprep.subr.mxu0 0.0
    %349 = vmatpush1.msra.mxu0 0.0
    %350 = vmatprep.subr.mxu0 0.0
    %351 = vmatpush1.msra.mxu0 0.0
    %352 = vmatprep.subr.mxu0 0.0
    %353 = vmatpush1.msra.mxu0 0.0
    %354 = vmatprep.subr.mxu0 0.0
    %355 = vmatpush1.msra.mxu0 0.0
    %356 = vmatprep.subr.mxu0 0.0
    %357 = vmatpush1.msra.mxu0 0.0
    %358 = vmatprep.subr.mxu0 0.0
    %359 = vmatpush1.msra.mxu0 0.0
    %360 = vmatprep.subr.mxu0 0.0
    %361 = vmatpush1.msra.mxu0 0.0
    %362 = vmatprep.subr.mxu0 0.0
    %363 = vmatpush1.msra.mxu0 0.0
    %364 = vmatprep.subr.mxu0 0.0
    %365 = vmatpush1.msra.mxu0 0.0
    %366 = vmatprep.mubr.f32.mxu0 0.0
    %v367 = vand.u32 %v33, 4294901760
    %v368 = vsub.f32 %v33, %v367
    %v369 = vand.u32 %v368, 4294901760
    %370 = vmatmul.mubr.f32.gmra.mrb[0].mxu0 %v369
    %v371 = vpop.f32.mrb[0].mxu0
    %v372 = vadd.f32 %v294, %v371
    %v373 = vpop.f32.mrb[0].mxu0
    %374 = vdwg.mxu0
    %375 = vmatprep.subr.mxu0 0.0
    %v376 = vand.u32 %v19, 4294901760
    %v377 = vsub.f32 %v19, %v376
    %v378 = vand.u32 %v377, 4294901760
    %379 = vmatpush1.msra.mxu0 %v378
    %380 = vmatprep.subr.mxu0 0.0
    %v381 = vand.u32 %v20, 4294901760
    %v382 = vsub.f32 %v20, %v381
    %v383 = vand.u32 %v382, 4294901760
    %384 = vmatpush1.msra.mxu0 %v383
    %385 = vmatprep.subr.mxu0 0.0
    %v386 = vand.u32 %v21, 4294901760
    %v387 = vsub.f32 %v21, %v386
    %v388 = vand.u32 %v387, 4294901760
    %389 = vmatpush1.msra.mxu0 %v388
    %390 = vmatprep.subr.mxu0 0.0
    %v391 = vand.u32 %v22, 4294901760
    %v392 = vsub.f32 %v22, %v391
    %v393 = vand.u32 %v392, 4294901760
    %394 = vmatpush1.msra.mxu0 %v393
    %395 = vmatprep.subr.mxu0 0.0
    %v396 = vand.u32 %v37, 4294901760
    %v397 = vsub.f32 %v37, %v396
    %v398 = vand.u32 %v397, 4294901760
    %399 = vmatpush1.msra.mxu0 %v398
    %400 = vmatprep.subr.mxu0 0.0
    %401 = vmatpush1.msra.mxu0 0.0
    %402 = vmatprep.subr.mxu0 0.0
    %403 = vmatpush1.msra.mxu0 0.0
    %404 = vmatprep.subr.mxu0 0.0
    %405 = vmatpush1.msra.mxu0 0.0
    %406 = vmatprep.subr.mxu0 0.0
    %407 = vmatpush1.msra.mxu0 0.0
    %408 = vmatprep.subr.mxu0 0.0
    %409 = vmatpush1.msra.mxu0 0.0
    %410 = vmatprep.subr.mxu0 0.0
    %411 = vmatpush1.msra.mxu0 0.0
    %412 = vmatprep.subr.mxu0 0.0
    %413 = vmatpush1.msra.mxu0 0.0
    %414 = vmatprep.subr.mxu0 0.0
    %415 = vmatpush1.msra.mxu0 0.0
    %416 = vmatprep.subr.mxu0 0.0
    %417 = vmatpush1.msra.mxu0 0.0
    %418 = vmatprep.subr.mxu0 0.0
    %419 = vmatpush1.msra.mxu0 0.0
    %420 = vmatprep.subr.mxu0 0.0
    %421 = vmatpush1.msra.mxu0 0.0
    %422 = vmatprep.subr.mxu0 0.0
    %423 = vmatpush1.msra.mxu0 0.0
    %424 = vmatprep.subr.mxu0 0.0
    %425 = vmatpush1.msra.mxu0 0.0
    %426 = vmatprep.subr.mxu0 0.0
    %427 = vmatpush1.msra.mxu0 0.0
    %428 = vmatprep.subr.mxu0 0.0
    %429 = vmatpush1.msra.mxu0 0.0
    %430 = vmatprep.subr.mxu0 0.0
    %431 = vmatpush1.msra.mxu0 0.0
    %432 = vmatprep.subr.mxu0 0.0
    %433 = vmatpush1.msra.mxu0 0.0
    %434 = vmatprep.subr.mxu0 0.0
    %435 = vmatpush1.msra.mxu0 0.0
    %436 = vmatprep.subr.mxu0 0.0
    %437 = vmatpush1.msra.mxu0 0.0
    %438 = vmatprep.subr.mxu0 0.0
    %439 = vmatpush1.msra.mxu0 0.0
    %440 = vmatprep.subr.mxu0 0.0
    %441 = vmatpush1.msra.mxu0 0.0
    %442 = vmatprep.subr.mxu0 0.0
    %443 = vmatpush1.msra.mxu0 0.0
    %444 = vmatprep.subr.mxu0 0.0
    %445 = vmatpush1.msra.mxu0 0.0
    %446 = vmatprep.subr.mxu0 0.0
    %447 = vmatpush1.msra.mxu0 0.0
    %448 = vmatprep.subr.mxu0 0.0
    %449 = vmatpush1.msra.mxu0 0.0
    %450 = vmatprep.subr.mxu0 0.0
    %451 = vmatpush1.msra.mxu0 0.0
    %452 = vmatprep.subr.mxu0 0.0
    %453 = vmatpush1.msra.mxu0 0.0
    %454 = vmatprep.mubr.f32.mxu0 0.0
    %v455 = vand.u32 %v33, 4294901760
    %456 = vmatmul.mubr.f32.gmra.mrb[0].mxu0 %v455
    %v457 = vpop.f32.mrb[0].mxu0
    %v458 = vadd.f32 %v372, %v457
    %v459 = vpop.f32.mrb[0].mxu0
    %460 = vdwg.mxu0
    %461 = vmatprep.subr.mxu0 0.0
    %v462 = vand.u32 %v19, 4294901760
    %463 = vmatpush1.msra.mxu0 %v462
    %464 = vmatprep.subr.mxu0 0.0
    %v465 = vand.u32 %v20, 4294901760
    %466 = vmatpush1.msra.mxu0 %v465
    %467 = vmatprep.subr.mxu0 0.0
    %v468 = vand.u32 %v21, 4294901760
    %469 = vmatpush1.msra.mxu0 %v468
    %470 = vmatprep.subr.mxu0 0.0
    %v471 = vand.u32 %v22, 4294901760
    %472 = vmatpush1.msra.mxu0 %v471
    %473 = vmatprep.subr.mxu0 0.0
    %v474 = vand.u32 %v37, 4294901760
    %475 = vmatpush1.msra.mxu0 %v474
    %476 = vmatprep.subr.mxu0 0.0
    %477 = vmatpush1.msra.mxu0 0.0
    %478 = vmatprep.subr.mxu0 0.0
    %479 = vmatpush1.msra.mxu0 0.0
    %480 = vmatprep.subr.mxu0 0.0
    %481 = vmatpush1.msra.mxu0 0.0
    %482 = vmatprep.subr.mxu0 0.0
    %483 = vmatpush1.msra.mxu0 0.0
    %484 = vmatprep.subr.mxu0 0.0
    %485 = vmatpush1.msra.mxu0 0.0
    %486 = vmatprep.subr.mxu0 0.0
    %487 = vmatpush1.msra.mxu0 0.0
    %488 = vmatprep.subr.mxu0 0.0
    %489 = vmatpush1.msra.mxu0 0.0
    %490 = vmatprep.subr.mxu0 0.0
    %491 = vmatpush1.msra.mxu0 0.0
    %492 = vmatprep.subr.mxu0 0.0
    %493 = vmatpush1.msra.mxu0 0.0
    %494 = vmatprep.subr.mxu0 0.0
    %495 = vmatpush1.msra.mxu0 0.0
    %496 = vmatprep.subr.mxu0 0.0
    %497 = vmatpush1.msra.mxu0 0.0
    %498 = vmatprep.subr.mxu0 0.0
    %499 = vmatpush1.msra.mxu0 0.0
    %500 = vmatprep.subr.mxu0 0.0
    %501 = vmatpush1.msra.mxu0 0.0
    %502 = vmatprep.subr.mxu0 0.0
    %503 = vmatpush1.msra.mxu0 0.0
    %504 = vmatprep.subr.mxu0 0.0
    %505 = vmatpush1.msra.mxu0 0.0
    %506 = vmatprep.subr.mxu0 0.0
    %507 = vmatpush1.msra.mxu0 0.0
    %508 = vmatprep.subr.mxu0 0.0
    %509 = vmatpush1.msra.mxu0 0.0
    %510 = vmatprep.subr.mxu0 0.0
    %511 = vmatpush1.msra.mxu0 0.0
    %512 = vmatprep.subr.mxu0 0.0
    %513 = vmatpush1.msra.mxu0 0.0
    %514 = vmatprep.subr.mxu0 0.0
    %515 = vmatpush1.msra.mxu0 0.0
    %516 = vmatprep.subr.mxu0 0.0
    %517 = vmatpush1.msra.mxu0 0.0
    %518 = vmatprep.subr.mxu0 0.0
    %519 = vmatpush1.msra.mxu0 0.0
    %520 = vmatprep.subr.mxu0 0.0
    %521 = vmatpush1.msra.mxu0 0.0
    %522 = vmatprep.subr.mxu0 0.0
    %523 = vmatpush1.msra.mxu0 0.0
    %524 = vmatprep.subr.mxu0 0.0
    %525 = vmatpush1.msra.mxu0 0.0
    %526 = vmatprep.subr.mxu0 0.0
    %527 = vmatpush1.msra.mxu0 0.0
    %528 = vmatprep.subr.mxu0 0.0
    %529 = vmatpush1.msra.mxu0 0.0
    %530 = vmatprep.mubr.f32.mxu0 0.0
    %v531 = vand.u32 %v33, 4294901760
    %532 = vmatmul.mubr.f32.gmra.mrb[0].mxu0 %v531
    %v533 = vpop.f32.mrb[0].mxu0
    %v534 = vadd.f32 %v458, %v533
    %v535 = vpop.f32.mrb[0].mxu0
    %536 = vdwg.mxu0
    %v537 = vmax.f32 %v534, 0.0
    %v538 = vld [vmem:[%s1] sm:$0xff]
    %540 = vrot.lane.b32.xlu0 %v538, 32
    %v541 = vpop.permute.xlu0 %540
    %vm543 = vcmask 261120
    %v544 = vsel %vm543, %v537, %v541
    %vm545 = vcmask 523264
    %546 = vst.msk [vmem:[#allocation2] sm:$0xff] %vm545, %v544
    // Predicated region
    $region18: #{tpu_custom_call.1} parent=1 // pred_check
      _
    $region19: #{tpu_custom_call.1} parent=1 // pred_check_branch
      %548 = sbr.rel (0) target = $region21
    $region20: #{tpu_custom_call.1} parent=1 // pred_region
      %s550 = ssub.s32 128, 128
      %551 = vsyncadd [#allocation3], %s550
      %s553 = sshll.u32 [#allocation2], 4
      %s554 = int_to_ptr.vmem [resolvable:$true] %s553
      %556 = dma.vmem_to_hbm [thread:$0]  %s554, 128, %s4, [#allocation3]
    $region21: #{tpu_custom_call.1} parent=1 // pred_fallthru
      _
    // Predicated region
    $region22: #{tpu_custom_call.1} parent=1 // pred_check
      _
    $region23: #{tpu_custom_call.1} parent=1 // pred_check_branch
      %558 = sbr.rel (0) target = $region25
    $region24: #{tpu_custom_call.1} parent=1 // pred_region
      %559 = dma.done [#allocation3], 128
    $region25: #{tpu_custom_call.1} parent=1 // pred_fallthru
      _
    %560 = vsyncpa [#allocation3], 1

</llo_original>
